<compile_context>
chip_gen: v6e
topology: v6e:2x2x1
jax: 0.10.0
libtpu: 0.0.40
codegen_flags: <defaults>
</compile_context>

<pallas_src>
import jax
import jax.numpy as jnp
from jax.experimental import pallas as pl
from jax.experimental.pallas import tpu as pltpu

D = 768                 # hidden dim of the fixed vector (6 x 128 -> lane-dense)
_SMALL_BATCH_MAX = 1024  # grid-free single block up to here (3 MiB output slab)
_BATCH_TILE = 1024       # batch tile for the large-B grid path


def _fixed_vector_kernel(fv_ref, out_ref):
    # fv_ref: (1, D) VMEM tile; out_ref: (tile_B, D) lane/sublane-dense slab.
    # Scale the single row first (cheap), then broadcast the zeroed row.
    # Exactly `fixed_vector.repeat(B,1,1) * 0.0`: zeros everywhere, NaN where
    # fixed_vector is non-finite.
    zero_row = fv_ref[...] * jnp.float32(0.0)
    out_ref[...] = jnp.broadcast_to(zero_row, out_ref.shape)


def fixed_vector_forward(image, fixed_vector):
    """image: (B, C, H, W) float32 (only the batch dim is used).
    fixed_vector: (1, 1, D) float32.
    Returns: (B, 1, D) float32."""
    batch = image.shape[0]
    fv2d = fixed_vector.reshape(1, D)  # lane-dense 2-D view of the parameter
    cost = pl.CostEstimate(
        flops=batch * D,
        transcendentals=0,
        bytes_accessed=4 * batch * D + 4 * D,
    )

    if batch <= _SMALL_BATCH_MAX:
        # Grid-free: one block, no pipeline/per-step overhead.
        out2d = pl.pallas_call(
            _fixed_vector_kernel,
            out_shape=jax.ShapeDtypeStruct((batch, D), jnp.float32),
            in_specs=[pl.BlockSpec((1, D), lambda: (0, 0))],
            out_specs=pl.BlockSpec((batch, D), lambda: (0, 0)),
            cost_estimate=cost,
        )(fv2d)
    else:
        # Large B: batch-tiled, "parallel" axis for megacore sharding (v7x)
        # and small resident blocks (v5e/v7x VMEM limits).
        out2d = pl.pallas_call(
            _fixed_vector_kernel,
            out_shape=jax.ShapeDtypeStruct((batch, D), jnp.float32),
            grid=(pl.cdiv(batch, _BATCH_TILE),),
            in_specs=[pl.BlockSpec((1, D), lambda i: (0, 0))],  # constant block
            out_specs=pl.BlockSpec((_BATCH_TILE, D), lambda i: (i, 0)),
            compiler_params=pltpu.CompilerParams(
                dimension_semantics=("parallel",)),
            cost_estimate=cost,
        )(fv2d)

    # Restore the module's (B, 1, D) output shape (metadata-only reshape).
    return out2d.reshape(batch, 1, D)


def init_params(key):
    """Deterministic parameter init mirroring FixedVector.__init__ shapes."""
    k_fv, _, _ = jax.random.split(key, 3)
    params = {
        # nn.Parameter(torch.randn((1, 1, 768)))
        "fixed_vector": jax.random.normal(k_fv, (1, 1, D), dtype=jnp.float32),
        # LayerNorm(32) x2 — declared in __init__ but unused in forward.
        "final_ln": {"weight": jnp.ones((32,), jnp.float32),
                     "bias": jnp.zeros((32,), jnp.float32)},
        "mapper": {"weight": jnp.ones((32,), jnp.float32),
                   "bias": jnp.zeros((32,), jnp.float32)},
    }
    return params


if __name__ == "__main__":
    key = jax.random.PRNGKey(0)
    params = init_params(key)

    # Small image input consistent with an encoder forward: (B, C, H, W)
    image = jax.random.normal(jax.random.PRNGKey(1), (2, 4, 16, 16),
                              dtype=jnp.float32)

    out = fixed_vector_forward(image, params["fixed_vector"])
    out = jax.block_until_ready(out)

    assert out.shape == (2, 1, D), out.shape
    assert out.dtype == jnp.float32, out.dtype
    # repeat(...) * 0.0 -> exact zeros for finite fixed_vector entries
    # (note: would be NaN for non-finite entries, matching torch).
    assert bool(jnp.all(out == 0.0))

    print("KERNEL_OK")
</pallas_src>

<mosaic_0001>
module attributes {stable_mosaic.version = 11 : i64} {
  func.func @_fixed_vector_kernel(%arg0: memref<1x768xf32, #tpu.memory_space<vmem>>, %arg1: memref<2x768xf32, #tpu.memory_space<vmem>>) attributes {dimension_semantics = [], scalar_prefetch = 0 : i64, scratch_operands = 0 : i64, tpu.core_type = #tpu.core_type<tc>} {
    %c0 = arith.constant 0 : index
    %c0_0 = arith.constant 0 : index
    %0 = vector.load %arg0[%c0, %c0_0] : memref<1x768xf32, #tpu.memory_space<vmem>>, vector<1x768xf32>
    %cst = arith.constant 0.000000e+00 : f32
    %1 = vector.broadcast %cst : f32 to vector<1x768xf32>
    %2 = arith.mulf %0, %1 : vector<1x768xf32>
    %3 = vector.shape_cast %2 : vector<1x768xf32> to vector<1x768xf32>
    %4 = vector.broadcast %3 : vector<1x768xf32> to vector<2x768xf32>
    %c0_1 = arith.constant 0 : index
    %c0_2 = arith.constant 0 : index
    %5 = vector.load %arg1[%c0_1, %c0_2] : memref<2x768xf32, #tpu.memory_space<vmem>>, vector<2x768xf32>
    tpu.vector_store %arg1[%c0_1, %c0_2], %4 {strides = array<i32>} : memref<2x768xf32, #tpu.memory_space<vmem>>, vector<2x768xf32>,
    return
  }
}

</mosaic_0001>

<llo_original>
// kernel: tpu_custom_call.1
$region0: #{tpu_custom_call.1}
  #allocation0 [shape = 'u32[]', space=smem, size = 0x4, offset = 0x4, fixed_abs, tag = 'smem constant byte address 0x4 - core index']
  #allocation1 [shape = 'u32[144,128]{1,0:T(1,128)}', space=vmem, size = 0x12000, scoped, tag = 'internal scratch']
  %s0 = inlined_call_operand.hbm [shape: f32[1,768], index: 0, kind: input, shape index: {}]
  %s1 = inlined_call_operand.hbm [shape: f32[2,768], index: 1, kind: output, shape index: {}]
  %s2 = sld [smem:[#allocation0]]
  $region18: #{tpu_custom_call.1} parent=0
    _
  %s4 = ssub.s32 1, %s2
  %s5 = scalar_select 0, %s4, %s2
  $region1: #{tpu_custom_call.1} parent=0
    #allocation2 [shape = 'u8[3072]{0}', space=vmem, size = 0xc00, scoped, tag = 'input window, operand 0, single buffered']
    #allocation3 [shape = 's32[1]{0}', space=sflag, size = 0x4, scoped, tag = 'scoped memory for tpu_custom_call.1']
    #allocation4 [shape = 's32[1]{0}', space=sflag, size = 0x4, scoped, tag = 'scoped memory for tpu_custom_call.1']
    #allocation5 [shape = 'u8[6144]{0}', space=vmem, size = 0x1800, scoped, tag = 'output window, operand 0, single buffered']
    %6 = vsyncpa [#allocation3], 0
    %7 = vsyncpa [#allocation4], 0
    // Predicated region
    $region2: #{tpu_custom_call.1} parent=1 // pred_check
      _
    $region3: #{tpu_custom_call.1} parent=1 // pred_check_branch
      %9 = sbr.rel (0) target = $region5
    $region4: #{tpu_custom_call.1} parent=1 // pred_region
      %s11 = ssub.s32 96, 96
      %12 = vsyncadd [#allocation3], %s11
      %s14 = sshll.u32 [#allocation2], 4
      %s15 = int_to_ptr.vmem [resolvable:$true] %s14
      %17 = dma.hbm_to_vmem [thread:$0]  %s0, 96, %s15, [#allocation3]
    $region5: #{tpu_custom_call.1} parent=1 // pred_fallthru
      _
    // Predicated region
    $region6: #{tpu_custom_call.1} parent=1 // pred_check
      _
    $region7: #{tpu_custom_call.1} parent=1 // pred_check_branch
      %19 = sbr.rel (0) target = $region9
    $region8: #{tpu_custom_call.1} parent=1 // pred_region
      %20 = dma.done [#allocation3], 96
    $region9: #{tpu_custom_call.1} parent=1 // pred_fallthru
      _
    %v21 = vld [vmem:[#allocation2] sm:$0x3f]
    %v22 = vmul.f32 %v21, 0.0
    %v24 = vlaneseq
    %v25 = vshrl.u32 %v24, 7
    %v26 = vsub.s32 0, %v25
    %v27 = vrot.slane %v22, %v26
    %v28 = vlaneseq
    %v29 = vshrl.u32 %v28, 7
    %v30 = vsub.s32 1, %v29
    %v31 = vrot.slane %v22, %v30
    %v32 = vlaneseq
    %v33 = vshrl.u32 %v32, 7
    %v34 = vsub.s32 2, %v33
    %v35 = vrot.slane %v22, %v34
    %v36 = vlaneseq
    %v37 = vshrl.u32 %v36, 7
    %v38 = vsub.s32 3, %v37
    %v39 = vrot.slane %v22, %v38
    %v40 = vlaneseq
    %v41 = vshrl.u32 %v40, 7
    %v42 = vsub.s32 4, %v41
    %v43 = vrot.slane %v22, %v42
    %v44 = vlaneseq
    %v45 = vshrl.u32 %v44, 7
    %v46 = vsub.s32 5, %v45
    %v47 = vrot.slane %v22, %v46
    %v48 = vcombine.low %v27, %v31
    %v49 = vcombine.low %v35, %v39
    %v51 = vunpack.c.l.s4 1983009808
    %v52 = vunpack.c.0.s8 %v51
    %v53 = vlaneseq
    %v54 = vshrl.u32 %v53, 7
    %v55 = vsub.s32 %v52, %v54
    %v56 = vrot.slane %v48, %v55
    %v58 = vunpack.c.l.s4 1983009808
    %v59 = vunpack.c.0.s8 %v58
    %v60 = vlaneseq
    %v61 = vshrl.u32 %v60, 7
    %v62 = vsub.s32 %v59, %v61
    %v63 = vrot.slane %v49, %v62
    %v64 = vcombine.low %v56, %v63
    %v65 = vcombine.low %v43, %v47
    %v67 = vunpack.c.l.s4 1983009808
    %v68 = vunpack.c.0.s8 %v67
    %v69 = vlaneseq
    %v70 = vshrl.u32 %v69, 7
    %v71 = vsub.s32 %v68, %v70
    %v72 = vrot.slane %v65, %v71
    %75 = vst [vmem:[#allocation5] sm:$0xff] %v64
    %76 = vst [vmem:[#allocation5 + $0x8] sm:$0xf] %v72
    // Predicated region
    $region10: #{tpu_custom_call.1} parent=1 // pred_check
      _
    $region11: #{tpu_custom_call.1} parent=1 // pred_check_branch
      %78 = sbr.rel (0) target = $region13
    $region12: #{tpu_custom_call.1} parent=1 // pred_region
      %s80 = ssub.s32 192, 192
      %81 = vsyncadd [#allocation4], %s80
      %s83 = sshll.u32 [#allocation5], 4
      %s84 = int_to_ptr.vmem [resolvable:$true] %s83
      %86 = dma.vmem_to_hbm [thread:$0]  %s84, 192, %s1, [#allocation4]
    $region13: #{tpu_custom_call.1} parent=1 // pred_fallthru
      _
    // Predicated region
    $region14: #{tpu_custom_call.1} parent=1 // pred_check
      _
    $region15: #{tpu_custom_call.1} parent=1 // pred_check_branch
      %88 = sbr.rel (0) target = $region17
    $region16: #{tpu_custom_call.1} parent=1 // pred_region
      %89 = dma.done [#allocation4], 192
    $region17: #{tpu_custom_call.1} parent=1 // pred_fallthru
      _
    %90 = vsyncpa [#allocation3], 1
    %91 = vsyncpa [#allocation4], 1

</llo_original>
